<compile_context>
chip_gen: v7x
topology: tpu7x:2x2x1
jax: 0.10.0
libtpu: 0.0.40
codegen_flags: <defaults>
</compile_context>

<pallas_src>
import functools

import jax
import jax.numpy as jnp
from jax.experimental import pallas as pl
from jax.experimental.pallas import tpu as pltpu


# ---------------------------------------------------------------------------
# Kernels
# ---------------------------------------------------------------------------

def _stats_kernel(x_ref, gamma_ref, beta_ref, scale_ref, shift_ref,
                  sum_sc, sumsq_sc, *, eps, inv_count):
    """Pass 1: accumulate per-channel sum / sumsq, finalize fused scale/shift.

    x_ref:     (N_tile, C, L_tile)  input tile
    gamma_ref: (1, C, 1)            sliced bn.weight
    beta_ref:  (1, C, 1)            sliced bn.bias
    scale_ref: (1, C, 1)  out       gamma / sqrt(var + eps)
    shift_ref: (1, C, 1)  out       beta - mean * scale
    sum_sc, sumsq_sc: (1, C, 1) f32 VMEM accumulators (persist across grid)
    """
    ni = pl.program_id(0)
    li = pl.program_id(1)

    @pl.when(jnp.logical_and(ni == 0, li == 0))
    def _init():
        sum_sc[...] = jnp.zeros_like(sum_sc)
        sumsq_sc[...] = jnp.zeros_like(sumsq_sc)

    x = x_ref[...].astype(jnp.float32)                      # (nt, C, lt)
    # Lane reduce first (fast XLU path), then collapse the batch-tile dim.
    ps = jnp.sum(x, axis=2, keepdims=True)                  # (nt, C, 1)
    pss = jnp.sum(x * x, axis=2, keepdims=True)             # (nt, C, 1)
    sum_sc[...] += jnp.sum(ps, axis=0, keepdims=True)       # (1, C, 1)
    sumsq_sc[...] += jnp.sum(pss, axis=0, keepdims=True)    # (1, C, 1)

    @pl.when(jnp.logical_and(ni == pl.num_programs(0) - 1,
                             li == pl.num_programs(1) - 1))
    def _finalize():
        inv_n = jnp.float32(inv_count)
        mean = sum_sc[...] * inv_n                                    # (1, C, 1)
        var = jnp.maximum(sumsq_sc[...] * inv_n - mean * mean, 0.0)   # biased
        inv_std = jax.lax.rsqrt(var + jnp.float32(eps))
        scale = gamma_ref[...] * inv_std
        scale_ref[...] = scale
        shift_ref[...] = beta_ref[...] - mean * scale


def _normalize_kernel(x_ref, scale_ref, shift_ref, y_ref):
    """Pass 2: y = x * scale_c + shift_c (single FMA per element)."""
    x = x_ref[...].astype(jnp.float32)              # (nt, C, lt)
    y = x * scale_ref[...] + shift_ref[...]         # broadcast (1, C, 1)
    y_ref[...] = y.astype(y_ref.dtype)


# ---------------------------------------------------------------------------
# Tiling helpers
# ---------------------------------------------------------------------------

def _pick_lane_tile(L):
    # Prefer large lane-dense tiles (multiples of 128); fall back to full L.
    for t in (2048, 1024, 512, 256, 128):
        if L % t == 0:
            return t
    return L


def _pick_batch_tile(N, C, lane_tile, itemsize, max_block_bytes=2 * 1024 * 1024):
    # Largest divisor of N keeping one (nt, C, lane_tile) block under budget
    # (sublane padding to 8 and f32 compute temps accounted for).
    eff_c = max(C, 8)
    eff_bytes = max(itemsize, 4)
    best = 1
    for nt in range(1, N + 1):
        if N % nt == 0 and nt * eff_c * lane_tile * eff_bytes <= max_block_bytes:
            best = nt
    return best


# ---------------------------------------------------------------------------
# Wrapper (forward of DynamicBatchNorm2d)
# ---------------------------------------------------------------------------

def dynamic_batchnorm2d(x, weight, bias, *, eps=1e-5):
    """Training-mode forward of DynamicBatchNorm2d.

    x:      (N, C, H, W)           NCHW input; feature_dim = C
    weight: (max_feature_dim,)     bn.weight (sliced to [:C])
    bias:   (max_feature_dim,)     bn.bias   (sliced to [:C])
    """
    N, C, H, W = x.shape
    L = H * W
    feature_dim = C

    # Free reshape (collapses contiguous trailing dims; no transpose, no copy).
    x3 = x.reshape(N, C, L)

    # Dynamic slicing of the affine parameters to the active channel count.
    gamma = weight[:feature_dim].astype(jnp.float32).reshape(1, feature_dim, 1)
    beta = bias[:feature_dim].astype(jnp.float32).reshape(1, feature_dim, 1)

    lt = _pick_lane_tile(L)
    nt = _pick_batch_tile(N, C, lt, jnp.dtype(x.dtype).itemsize)
    grid = (N // nt, L // lt)

    x_spec = pl.BlockSpec((nt, C, lt), lambda ni, li: (ni, 0, li))
    param_spec = pl.BlockSpec((1, C, 1), lambda ni, li: (0, 0, 0))
    vmem_limit = 32 * 1024 * 1024

    # --- Pass 1: per-channel statistics -> fused scale / shift -------------
    scale, shift = pl.pallas_call(
        functools.partial(_stats_kernel, eps=eps, inv_count=1.0 / (N * L)),
        out_shape=(jax.ShapeDtypeStruct((1, C, 1), jnp.float32),
                   jax.ShapeDtypeStruct((1, C, 1), jnp.float32)),
        grid_spec=pltpu.PrefetchScalarGridSpec(
            num_scalar_prefetch=0,
            grid=grid,
            in_specs=[x_spec, param_spec, param_spec],
            out_specs=(param_spec, param_spec),
            scratch_shapes=[pltpu.VMEM((1, C, 1), jnp.float32),
                            pltpu.VMEM((1, C, 1), jnp.float32)]),
        compiler_params=pltpu.CompilerParams(
            dimension_semantics=("arbitrary", "arbitrary"),
            vmem_limit_bytes=vmem_limit),
    )(x3, gamma, beta)

    # --- Pass 2: streamed normalize (independent tiles -> parallel axes) ---
    y3 = pl.pallas_call(
        _normalize_kernel,
        out_shape=jax.ShapeDtypeStruct((N, C, L), x.dtype),
        grid_spec=pltpu.PrefetchScalarGridSpec(
            num_scalar_prefetch=0,
            grid=grid,
            in_specs=[x_spec, param_spec, param_spec],
            out_specs=x_spec),
        compiler_params=pltpu.CompilerParams(
            dimension_semantics=("parallel", "parallel"),
            vmem_limit_bytes=vmem_limit),
    )(x3, scale, shift)

    # Free reshape back to NCHW.
    return y3.reshape(N, C, H, W)

    # TODO(synk): running_mean/running_var/num_batches_tracked updates are
    # side-effecting buffers in the PyTorch module and are not modeled; the
    # training-mode forward output does not depend on them.


# ---------------------------------------------------------------------------
# Pure-JAX reference & demo
# ---------------------------------------------------------------------------

def _reference(x, weight, bias, eps=1e-5):
    C = x.shape[1]
    mean = jnp.mean(x, axis=(0, 2, 3), keepdims=True)
    var = jnp.mean((x - mean) ** 2, axis=(0, 2, 3), keepdims=True)
    g = weight[:C].reshape(1, C, 1, 1)
    b = bias[:C].reshape(1, C, 1, 1)
    return (x - mean) / jnp.sqrt(var + eps) * g + b


if __name__ == "__main__":
    key = jax.random.PRNGKey(0)
    k_x, k_w, k_b = jax.random.split(key, 3)

    max_feature_dim = 8          # bn = nn.BatchNorm2d(max_feature_dim)
    N, C, H, W = 2, 4, 16, 16    # active feature_dim (C=4) < max_feature_dim

    x = jax.random.normal(k_x, (N, C, H, W), dtype=jnp.float32)
    weight = 1.0 + 0.1 * jax.random.normal(k_w, (max_feature_dim,), dtype=jnp.float32)
    bias = 0.1 * jax.random.normal(k_b, (max_feature_dim,), dtype=jnp.float32)

    y = dynamic_batchnorm2d(x, weight, bias)
    jax.block_until_ready(y)

    y_ref = _reference(x, weight, bias)
    assert y.shape == (N, C, H, W)
    assert jnp.allclose(y, y_ref, atol=1e-4, rtol=1e-4), float(
        jnp.max(jnp.abs(y - y_ref)))
    print("KERNEL_OK")
</pallas_src>

<mosaic_0001>
module attributes {stable_mosaic.version = 11 : i64} {
  func.func @_stats_kernel(%arg0: i32, %arg1: i32, %arg2: memref<2x4x256xf32, #tpu.memory_space<vmem>>, %arg3: memref<1x4x1xf32, #tpu.memory_space<vmem>>, %arg4: memref<1x4x1xf32, #tpu.memory_space<vmem>>, %arg5: memref<1x4x1xf32, #tpu.memory_space<vmem>>, %arg6: memref<1x4x1xf32, #tpu.memory_space<vmem>>, %arg7: memref<1x4x1xf32, #tpu.memory_space<vmem>>, %arg8: memref<1x4x1xf32, #tpu.memory_space<vmem>>) attributes {dimension_semantics = [#tpu.dimension_semantics<arbitrary>, #tpu.dimension_semantics<arbitrary>], iteration_bounds = array<i64: 1, 1>, scalar_prefetch = 0 : i64, scratch_operands = 2 : i64, tpu.core_type = #tpu.core_type<tc>, window_params = [{transform_indices = @transform_0, window_bounds = array<i64: 2, 4, 256>}, {pipeline_mode = #tpu.pipeline_mode<synchronous>, transform_indices = @transform_1, window_bounds = array<i64: 1, 4, 1>}, {pipeline_mode = #tpu.pipeline_mode<synchronous>, transform_indices = @transform_2, window_bounds = array<i64: 1, 4, 1>}, {pipeline_mode = #tpu.pipeline_mode<synchronous>, transform_indices = @transform_3, window_bounds = array<i64: 1, 4, 1>}, {pipeline_mode = #tpu.pipeline_mode<synchronous>, transform_indices = @transform_4, window_bounds = array<i64: 1, 4, 1>}]} {
    %c0_i32 = arith.constant 0 : i32
    %0 = arith.cmpi eq, %arg0, %c0_i32 : i32
    %c0_i32_0 = arith.constant 0 : i32
    %1 = arith.cmpi eq, %arg1, %c0_i32_0 : i32
    %2 = arith.andi %0, %1 : i1
    %3 = arith.extui %2 : i1 to i32
    %c0_i32_1 = arith.constant 0 : i32
    %4 = arith.cmpi ne, %3, %c0_i32_1 : i32
    scf.if %4 {
      %cst_22 = arith.constant 0.000000e+00 : f32
      %26 = vector.broadcast %cst_22 : f32 to vector<1x4x1xf32>
      %c0_23 = arith.constant 0 : index
      %c0_24 = arith.constant 0 : index
      %c0_25 = arith.constant 0 : index
      %27 = vector.load %arg7[%c0_23, %c0_24, %c0_25] : memref<1x4x1xf32, #tpu.memory_space<vmem>>, vector<1x4x1xf32>
      tpu.vector_store %arg7[%c0_23, %c0_24, %c0_25], %26 {strides = array<i32>} : memref<1x4x1xf32, #tpu.memory_space<vmem>>, vector<1x4x1xf32>,
      %cst_26 = arith.constant 0.000000e+00 : f32
      %28 = vector.broadcast %cst_26 : f32 to vector<1x4x1xf32>
      %c0_27 = arith.constant 0 : index
      %c0_28 = arith.constant 0 : index
      %c0_29 = arith.constant 0 : index
      %29 = vector.load %arg8[%c0_27, %c0_28, %c0_29] : memref<1x4x1xf32, #tpu.memory_space<vmem>>, vector<1x4x1xf32>
      tpu.vector_store %arg8[%c0_27, %c0_28, %c0_29], %28 {strides = array<i32>} : memref<1x4x1xf32, #tpu.memory_space<vmem>>, vector<1x4x1xf32>,
    } else {
    }
    %c0 = arith.constant 0 : index
    %c0_2 = arith.constant 0 : index
    %c0_3 = arith.constant 0 : index
    %5 = vector.load %arg2[%c0, %c0_2, %c0_3] : memref<2x4x256xf32, #tpu.memory_space<vmem>>, vector<2x4x256xf32>
    %cst = arith.constant dense<0.000000e+00> : vector<2x4xf32>
    %6 = vector.multi_reduction <add>, %5, %cst [2] : vector<2x4x256xf32> to vector<2x4xf32>
    %7 = vector.shape_cast %6 : vector<2x4xf32> to vector<2x4x1xf32>
    %8 = arith.mulf %5, %5 : vector<2x4x256xf32>
    %cst_4 = arith.constant dense<0.000000e+00> : vector<2x4xf32>
    %9 = vector.multi_reduction <add>, %8, %cst_4 [2] : vector<2x4x256xf32> to vector<2x4xf32>
    %10 = vector.shape_cast %9 : vector<2x4xf32> to vector<2x4x1xf32>
    %c0_5 = arith.constant 0 : index
    %c0_6 = arith.constant 0 : index
    %c0_7 = arith.constant 0 : index
    %11 = vector.load %arg7[%c0_5, %c0_6, %c0_7] : memref<1x4x1xf32, #tpu.memory_space<vmem>>, vector<1x4x1xf32>
    %cst_8 = arith.constant dense<0.000000e+00> : vector<4x1xf32>
    %12 = vector.multi_reduction <add>, %7, %cst_8 [0] : vector<2x4x1xf32> to vector<4x1xf32>
    %13 = vector.shape_cast %12 : vector<4x1xf32> to vector<1x4x1xf32>
    %14 = arith.addf %11, %13 : vector<1x4x1xf32>
    %c0_9 = arith.constant 0 : index
    %c0_10 = arith.constant 0 : index
    %c0_11 = arith.constant 0 : index
    %15 = vector.load %arg7[%c0_9, %c0_10, %c0_11] : memref<1x4x1xf32, #tpu.memory_space<vmem>>, vector<1x4x1xf32>
    tpu.vector_store %arg7[%c0_9, %c0_10, %c0_11], %14 {strides = array<i32>} : memref<1x4x1xf32, #tpu.memory_space<vmem>>, vector<1x4x1xf32>,
    %c0_12 = arith.constant 0 : index
    %c0_13 = arith.constant 0 : index
    %c0_14 = arith.constant 0 : index
    %16 = vector.load %arg8[%c0_12, %c0_13, %c0_14] : memref<1x4x1xf32, #tpu.memory_space<vmem>>, vector<1x4x1xf32>
    %cst_15 = arith.constant dense<0.000000e+00> : vector<4x1xf32>
    %17 = vector.multi_reduction <add>, %10, %cst_15 [0] : vector<2x4x1xf32> to vector<4x1xf32>
    %18 = vector.shape_cast %17 : vector<4x1xf32> to vector<1x4x1xf32>
    %19 = arith.addf %16, %18 : vector<1x4x1xf32>
    %c0_16 = arith.constant 0 : index
    %c0_17 = arith.constant 0 : index
    %c0_18 = arith.constant 0 : index
    %20 = vector.load %arg8[%c0_16, %c0_17, %c0_18] : memref<1x4x1xf32, #tpu.memory_space<vmem>>, vector<1x4x1xf32>
    tpu.vector_store %arg8[%c0_16, %c0_17, %c0_18], %19 {strides = array<i32>} : memref<1x4x1xf32, #tpu.memory_space<vmem>>, vector<1x4x1xf32>,
    %c0_i32_19 = arith.constant 0 : i32
    %21 = arith.cmpi eq, %arg0, %c0_i32_19 : i32
    %c0_i32_20 = arith.constant 0 : i32
    %22 = arith.cmpi eq, %arg1, %c0_i32_20 : i32
    %23 = arith.andi %21, %22 : i1
    %24 = arith.extui %23 : i1 to i32
    %c0_i32_21 = arith.constant 0 : i32
    %25 = arith.cmpi ne, %24, %c0_i32_21 : i32
    scf.if %25 {
      %c0_22 = arith.constant 0 : index
      %c0_23 = arith.constant 0 : index
      %c0_24 = arith.constant 0 : index
      %26 = vector.load %arg7[%c0_22, %c0_23, %c0_24] : memref<1x4x1xf32, #tpu.memory_space<vmem>>, vector<1x4x1xf32>
      %cst_25 = arith.constant 0.001953125 : f32
      %27 = vector.broadcast %cst_25 : f32 to vector<1x4x1xf32>
      %28 = arith.mulf %26, %27 : vector<1x4x1xf32>
      %c0_26 = arith.constant 0 : index
      %c0_27 = arith.constant 0 : index
      %c0_28 = arith.constant 0 : index
      %29 = vector.load %arg8[%c0_26, %c0_27, %c0_28] : memref<1x4x1xf32, #tpu.memory_space<vmem>>, vector<1x4x1xf32>
      %cst_29 = arith.constant 0.001953125 : f32
      %30 = vector.broadcast %cst_29 : f32 to vector<1x4x1xf32>
      %31 = arith.mulf %29, %30 : vector<1x4x1xf32>
      %32 = arith.mulf %28, %28 : vector<1x4x1xf32>
      %33 = arith.subf %31, %32 : vector<1x4x1xf32>
      %cst_30 = arith.constant 0.000000e+00 : f32
      %34 = vector.broadcast %cst_30 : f32 to vector<1x4x1xf32>
      %35 = arith.maximumf %33, %34 : vector<1x4x1xf32>
      %cst_31 = arith.constant 9.99999974E-6 : f32
      %36 = vector.broadcast %cst_31 : f32 to vector<1x4x1xf32>
      %37 = arith.addf %35, %36 : vector<1x4x1xf32>
      %38 = math.rsqrt %37 : vector<1x4x1xf32>
      %c0_32 = arith.constant 0 : index
      %c0_33 = arith.constant 0 : index
      %c0_34 = arith.constant 0 : index
      %39 = vector.load %arg3[%c0_32, %c0_33, %c0_34] : memref<1x4x1xf32, #tpu.memory_space<vmem>>, vector<1x4x1xf32>
      %40 = arith.mulf %39, %38 : vector<1x4x1xf32>
      %c0_35 = arith.constant 0 : index
      %c0_36 = arith.constant 0 : index
      %c0_37 = arith.constant 0 : index
      %41 = vector.load %arg5[%c0_35, %c0_36, %c0_37] : memref<1x4x1xf32, #tpu.memory_space<vmem>>, vector<1x4x1xf32>
      tpu.vector_store %arg5[%c0_35, %c0_36, %c0_37], %40 {strides = array<i32>} : memref<1x4x1xf32, #tpu.memory_space<vmem>>, vector<1x4x1xf32>,
      %c0_38 = arith.constant 0 : index
      %c0_39 = arith.constant 0 : index
      %c0_40 = arith.constant 0 : index
      %42 = vector.load %arg4[%c0_38, %c0_39, %c0_40] : memref<1x4x1xf32, #tpu.memory_space<vmem>>, vector<1x4x1xf32>
      %43 = arith.mulf %28, %40 : vector<1x4x1xf32>
      %44 = arith.subf %42, %43 : vector<1x4x1xf32>
      %c0_41 = arith.constant 0 : index
      %c0_42 = arith.constant 0 : index
      %c0_43 = arith.constant 0 : index
      %45 = vector.load %arg6[%c0_41, %c0_42, %c0_43] : memref<1x4x1xf32, #tpu.memory_space<vmem>>, vector<1x4x1xf32>
      tpu.vector_store %arg6[%c0_41, %c0_42, %c0_43], %44 {strides = array<i32>} : memref<1x4x1xf32, #tpu.memory_space<vmem>>, vector<1x4x1xf32>,
    } else {
    }
    return
  }
  func.func @transform_0(%arg0: i32, %arg1: i32) -> (i32, i32, i32) {
    %c0_i32 = arith.constant 0 : i32
    %c0_i32_0 = arith.constant 0 : i32
    return %arg0, %c0_i32, %arg1 : i32, i32, i32
  }
  func.func @transform_1(%arg0: i32, %arg1: i32) -> (i32, i32, i32) {
    %c0_i32 = arith.constant 0 : i32
    %c0_i32_0 = arith.constant 0 : i32
    %c0_i32_1 = arith.constant 0 : i32
    %c0_i32_2 = arith.constant 0 : i32
    return %c0_i32, %c0_i32_0, %c0_i32_1 : i32, i32, i32
  }
  func.func @transform_2(%arg0: i32, %arg1: i32) -> (i32, i32, i32) {
    %c0_i32 = arith.constant 0 : i32
    %c0_i32_0 = arith.constant 0 : i32
    %c0_i32_1 = arith.constant 0 : i32
    %c0_i32_2 = arith.constant 0 : i32
    return %c0_i32, %c0_i32_0, %c0_i32_1 : i32, i32, i32
  }
  func.func @transform_3(%arg0: i32, %arg1: i32) -> (i32, i32, i32) {
    %c0_i32 = arith.constant 0 : i32
    %c0_i32_0 = arith.constant 0 : i32
    %c0_i32_1 = arith.constant 0 : i32
    %c0_i32_2 = arith.constant 0 : i32
    return %c0_i32, %c0_i32_0, %c0_i32_1 : i32, i32, i32
  }
  func.func @transform_4(%arg0: i32, %arg1: i32) -> (i32, i32, i32) {
    %c0_i32 = arith.constant 0 : i32
    %c0_i32_0 = arith.constant 0 : i32
    %c0_i32_1 = arith.constant 0 : i32
    %c0_i32_2 = arith.constant 0 : i32
    return %c0_i32, %c0_i32_0, %c0_i32_1 : i32, i32, i32
  }
}

</mosaic_0001>

<llo_original>
// kernel: tpu_custom_call.1
$region0: #{tpu_custom_call.1}
  #allocation0 [shape = 'u32[]', space=smem, size = 0x4, offset = 0x4, fixed_abs, tag = 'smem constant byte address 0x4 - core index']
  #allocation1 [shape = 'u32[144,128]{1,0:T(1,128)}', space=vmem, size = 0x12000, scoped, tag = 'internal scratch']
  #allocation2 [shape = 'f32[1,4,1]{2,1,0:T(4,128)}', space=vmem, size = 0x800, scoped, tag = 'scratch operand']
  #allocation3 [shape = 'f32[1,4,1]{2,1,0:T(4,128)}', space=vmem, size = 0x800, scoped, tag = 'scratch operand']
  %s0 = inlined_call_operand.hbm [shape: f32[2,4,256], index: 0, kind: input, shape index: {}]
  %s1 = inlined_call_operand.vmem [shape: f32[1,4,1], index: 1, kind: input, shape index: {}]
  %s2 = inlined_call_operand.vmem [shape: f32[1,4,1], index: 2, kind: input, shape index: {}]
  %s3 = inlined_call_operand.vmem [shape: f32[1,4,1], index: 3, kind: output, shape index: {0}]
  %s4 = inlined_call_operand.vmem [shape: f32[1,4,1], index: 4, kind: output, shape index: {1}]
  %5 = xla_tuple %s3, %s4
  %s6 = sld [smem:[#allocation0]]
  $region42: #{tpu_custom_call.1} parent=0
    _
  %s8 = ssub.s32 1, %s6
  %s9 = scalar_select 0, %s8, %s6
  $region1: #{tpu_custom_call.1} parent=0
    #allocation4 [shape = 'u8[8192]{0}', space=vmem, size = 0x2000, scoped, tag = 'input window, operand 0, single buffered']
    #allocation5 [shape = 's32[1]{0}', space=sflag, size = 0x4, scoped, tag = 'scoped memory for tpu_custom_call.1']
    %10 = vsyncpa [#allocation5], 0
    // Predicated region
    $region2: #{tpu_custom_call.1} parent=1 // pred_check
      _
    $region3: #{tpu_custom_call.1} parent=1 // pred_check_branch
      %12 = sbr.rel (0) target = $region5
    $region4: #{tpu_custom_call.1} parent=1 // pred_region
      %s14 = ssub.s32 256, 256
      %15 = vsyncadd [#allocation5], %s14
      %s16 = sshll.u32 [#allocation4], 4
      %s17 = int_to_ptr.vmem [resolvable:$true] %s16
      %22 = dma.hbm_to_vmem [thread:$0]  %s0, 256, %s17, [#allocation5], 128, 128, 8
    $region5: #{tpu_custom_call.1} parent=1 // pred_fallthru
      _
    // Predicated region
    $region6: #{tpu_custom_call.1} parent=1 // pred_check
      _
    $region7: #{tpu_custom_call.1} parent=1 // pred_check_branch
      %24 = sbr.rel (0) target = $region9
    $region8: #{tpu_custom_call.1} parent=1 // pred_region
      _
    $region9: #{tpu_custom_call.1} parent=1 // pred_fallthru
      _
    // Predicated region
    $region10: #{tpu_custom_call.1} parent=1 // pred_check
      _
    $region11: #{tpu_custom_call.1} parent=1 // pred_check_branch
      %26 = sbr.rel (0) target = $region13
    $region12: #{tpu_custom_call.1} parent=1 // pred_region
      _
    $region13: #{tpu_custom_call.1} parent=1 // pred_fallthru
      _
    // Predicated region
    $region14: #{tpu_custom_call.1} parent=1 // pred_check
      _
    $region15: #{tpu_custom_call.1} parent=1 // pred_check_branch
      %28 = sbr.rel (0) target = $region17
    $region16: #{tpu_custom_call.1} parent=1 // pred_region
      %29 = dma.done [#allocation5], 256
    $region17: #{tpu_custom_call.1} parent=1 // pred_fallthru
      _
    %p30 = scmp.eq.s32.totalorder 0, 0
    %p31 = scmp.eq.s32.totalorder 0, 0
    %p32 = pnand %p30, %p31
    %p33 = pneg %p32
    // Predicated region
    $region18: #{tpu_custom_call.1} parent=1 // pred_check
      _
    $region19: #{tpu_custom_call.1} parent=1 // pred_check_branch
      %35 = sbr.rel (%p32) target = $region21
    $region20: #{tpu_custom_call.1} parent=1 // pred_region
      %vm36 = vcmask 3072
      %37 = vst.msk [vmem:[#allocation2] sm:$0xf] %vm36, 0.0
      %38 = vst.msk [vmem:[#allocation3] sm:$0xf] %vm36, 0.0
    $region21: #{tpu_custom_call.1} parent=1 // pred_fallthru
      _
    %v39 = vld [vmem:[#allocation4] sm:$0xff]
    %v40 = vld [vmem:[#allocation4 + $0x8] sm:$0xff]
    %v43 = vcombine.high %v39, %v39
    %v44 = vcombine.high %v40, %v40
    %vm47 = vcmask 1043456
    %v48 = vsel %vm47, %v39, 0.0
    %v49 = vsel %vm47, %v43, 0.0
    %v50 = vadd.f32 %v48, %v49
    %51 = vadd.xlane.f32.xlu0 %v50
    %v52 = vpop.xlane.xlu0 %51
    %v53 = vsel %vm47, %v40, 0.0
    %v54 = vsel %vm47, %v44, 0.0
    %v55 = vadd.f32 %v53, %v54
    %56 = vadd.xlane.f32.xlu0 %v55
    %v57 = vpop.xlane.xlu0 %56
    %v58 = vmul.f32 %v39, %v39
    %v59 = vmul.f32 %v40, %v40
    %v62 = vcombine.high %v58, %v58
    %v63 = vcombine.high %v59, %v59
    %v66 = vsel %vm47, %v58, 0.0
    %v67 = vsel %vm47, %v62, 0.0
    %v68 = vadd.f32 %v66, %v67
    %69 = vadd.xlane.f32.xlu0 %v68
    %v70 = vpop.xlane.xlu0 %69
    %v71 = vsel %vm47, %v59, 0.0
    %v72 = vsel %vm47, %v63, 0.0
    %v73 = vadd.f32 %v71, %v72
    %74 = vadd.xlane.f32.xlu0 %v73
    %v75 = vpop.xlane.xlu0 %74
    %v76 = vld [vmem:[#allocation2] sm:$0xf]
    %v77 = vsel %vm47, %v52, 0.0
    %v78 = vsel %vm47, %v57, 0.0
    %v79 = vadd.f32 %v77, %v78
    %v80 = vadd.f32 %v76, %v79
    %vm81 = vcmask 3072
    %82 = vst.msk [vmem:[#allocation2] sm:$0xf] %vm81, %v80
    %v83 = vld [vmem:[#allocation3] sm:$0xf]
    %v84 = vsel %vm47, %v70, 0.0
    %v85 = vsel %vm47, %v75, 0.0
    %v86 = vadd.f32 %v84, %v85
    %v87 = vadd.f32 %v83, %v86
    %88 = vst.msk [vmem:[#allocation3] sm:$0xf] %vm81, %v87
    // Predicated region
    $region22: #{tpu_custom_call.1} parent=1 // pred_check
      _
    $region23: #{tpu_custom_call.1} parent=1 // pred_check_branch
      %90 = sbr.rel (%p32) target = $region25
    $region24: #{tpu_custom_call.1} parent=1 // pred_region
      %v91 = vld [vmem:[#allocation2] sm:$0xf]
      %v92 = vmul.f32 %v91, 0.001953125
      %v93 = vld [vmem:[#allocation3] sm:$0xf]
      %v94 = vmul.f32 %v93, 0.001953125
      %v95 = vmul.f32 %v92, %v92
      %v96 = vsub.f32 %v94, %v95
      %v97 = vmax.f32 %v96, 0.0
      %v98 = vadd.f32 %v97, 1e-05
      %v99 = vrsqrt.pop %v98
      %v100 = vld [vmem:[%s1] sm:$0xf]
      %v101 = vmul.f32 %v100, %v99
      %102 = vst.msk [vmem:[%s3] sm:$0xf] %vm81, %v101
      %v103 = vld [vmem:[%s2] sm:$0xf]
      %v104 = vmul.f32 %v92, %v101
      %v105 = vsub.f32 %v103, %v104
      %106 = vst.msk [vmem:[%s4] sm:$0xf] %vm81, %v105
    $region25: #{tpu_custom_call.1} parent=1 // pred_fallthru
      _
    // Predicated region
    $region26: #{tpu_custom_call.1} parent=1 // pred_check
      _
    $region27: #{tpu_custom_call.1} parent=1 // pred_check_branch
      %108 = sbr.rel (0) target = $region29
    $region28: #{tpu_custom_call.1} parent=1 // pred_region
      _
    $region29: #{tpu_custom_call.1} parent=1 // pred_fallthru
      _
    // Predicated region
    $region30: #{tpu_custom_call.1} parent=1 // pred_check
      _
    $region31: #{tpu_custom_call.1} parent=1 // pred_check_branch
      %110 = sbr.rel (0) target = $region33
    $region32: #{tpu_custom_call.1} parent=1 // pred_region
      _
    $region33: #{tpu_custom_call.1} parent=1 // pred_fallthru
      _
    // Predicated region
    $region34: #{tpu_custom_call.1} parent=1 // pred_check
      _
    $region35: #{tpu_custom_call.1} parent=1 // pred_check_branch
      %112 = sbr.rel (0) target = $region37
    $region36: #{tpu_custom_call.1} parent=1 // pred_region
      _
    $region37: #{tpu_custom_call.1} parent=1 // pred_fallthru
      _
    // Predicated region
    $region38: #{tpu_custom_call.1} parent=1 // pred_check
      _
    $region39: #{tpu_custom_call.1} parent=1 // pred_check_branch
      %114 = sbr.rel (0) target = $region41
    $region40: #{tpu_custom_call.1} parent=1 // pred_region
      _
    $region41: #{tpu_custom_call.1} parent=1 // pred_fallthru
      _
    %115 = vsyncpa [#allocation5], 1

</llo_original>
